<compile_context>
chip_gen: v6e
topology: v6e:2x2x1
jax: 0.10.0
libtpu: 0.0.40
codegen_flags: <defaults>
</compile_context>

<pallas_src>
import math
from functools import partial

import jax
import jax.numpy as jnp
from jax.experimental import pallas as pl
from jax.experimental.pallas import tpu as pltpu


# ----------------------------- small helpers -----------------------------

def _layer_norm(x, g, b, eps=1e-5):
    mu = jnp.mean(x, axis=-1, keepdims=True)
    xc = x - mu
    var = jnp.mean(xc * xc, axis=-1, keepdims=True)
    return xc * jax.lax.rsqrt(var + eps) * g + b


def _swap_leading(x):
    """(a, b, d) -> (b, a, d), keeping the minor (lane) dim in place."""
    if hasattr(pltpu, "einshape"):
        return pltpu.einshape("abd->bad", x)     # lane-layout aware transpose
    return jnp.swapaxes(x, 0, 1)


def _vmem_limit_bytes():
    # ~100 MiB on v5e/v6e (128 MiB physical), ~54 MiB on v7x (64 MiB physical).
    try:
        cap = int(pltpu.get_tpu_info().vmem_capacity_bytes)
        return max(32 << 20, min(100 << 20, int(cap * 0.85)))
    except Exception:
        return 64 << 20


# ----------------------------- kernel 1: projector + PE -----------------------------

def _projector_kernel(feats_ref, wp_ref, bp_ref, pe_ref, o_ref, *, d_model):
    y = jnp.dot(feats_ref[...], wp_ref[...],
                preferred_element_type=jnp.float32) + bp_ref[...]
    o_ref[...] = y * jnp.float32(math.sqrt(d_model)) + pe_ref[...]


def projector_pallas(feats2d, pe2d, w_proj, b_proj, *, d_model, rows, n_bt):
    f_pad = feats2d.shape[1]
    return pl.pallas_call(
        partial(_projector_kernel, d_model=d_model),
        out_shape=jax.ShapeDtypeStruct((feats2d.shape[0], d_model), jnp.float32),
        grid=(n_bt,),
        in_specs=[pl.BlockSpec((rows, f_pad), lambda i: (i, 0)),
                  pl.BlockSpec((f_pad, d_model), lambda i: (0, 0)),
                  pl.BlockSpec((1, d_model), lambda i: (0, 0)),
                  pl.BlockSpec((rows, d_model), lambda i: (i, 0))],
        out_specs=pl.BlockSpec((rows, d_model), lambda i: (i, 0)),
        compiler_params=pltpu.CompilerParams(dimension_semantics=("parallel",)),
    )(feats2d, w_proj, b_proj, pe2d)


# ----------------------------- kernel 2: fused transformer stack -----------------------------

def _stack_kernel(*refs, n_heads, use_mask):
    """One grid step = one (batch-tile, layer) pair; the layer axis is inner/arbitrary.

    The output block index is constant along the layer axis, so o_ref is the VMEM-resident
    activation (residual-stream) buffer for all layers of this batch tile.
    """
    if use_mask:
        (x0_ref, mask_ref, wqkv_ref, bqkv_ref, wo_ref, bo_ref,
         g1_ref, bn1_ref, w1_ref, b1_ref, w2_ref, b2_ref,
         g2_ref, bn2_ref, o_ref) = refs
    else:
        (x0_ref, wqkv_ref, bqkv_ref, wo_ref, bo_ref,
         g1_ref, bn1_ref, w1_ref, b1_ref, w2_ref, b2_ref,
         g2_ref, bn2_ref, o_ref) = refs

    l = pl.program_id(1)

    # l == 0: seed the residual stream with the projector + PE output.
    @pl.when(l == 0)
    def _():
        o_ref[...] = x0_ref[...]

    x = o_ref[...]                              # (R, D) f32 residual stream
    R, D = x.shape
    H = n_heads
    dh = D // H

    xb = x.astype(jnp.bfloat16)

    # ---- fused QKV: one wide (R, D) x (D, 3D) MXU matmul, f32 accumulation ----------
    qkv = jnp.dot(xb, wqkv_ref[0],
                  preferred_element_type=jnp.float32) + bqkv_ref[0]      # (R, 3D) f32

    # head-major relayout: (R, 3D) -> (R, 3H, dh) -> (3H, R, dh); 1/sqrt(dh) is already
    # folded into the packed q weights/bias.
    qkv = _swap_leading(qkv.reshape(R, 3 * H, dh)).astype(jnp.bfloat16)  # (3H, R, dh)
    q = qkv[:H]
    k = qkv[H:2 * H]
    v = qkv[2 * H:]

    # ---- batched-head attention; softmax math in f32 --------------------------------
    s = jnp.einsum('hqd,hkd->hqk', q, k,
                   preferred_element_type=jnp.float32)                   # (H, R, R) f32
    if use_mask:
        # block-diagonal additive mask isolates the sequences packed into this row tile
        s = s + mask_ref[...]
    s = s - jnp.max(s, axis=-1, keepdims=True)
    p = jnp.exp(s)
    p = p * pl.reciprocal(jnp.sum(p, axis=-1, keepdims=True), approx=True)
    ctx = jnp.einsum('hqk,hkd->hqd', p.astype(jnp.bfloat16), v,
                     preferred_element_type=jnp.float32)                 # (H, R, dh) f32

    # ---- output projection: merge heads once, then one wide (R, D) x (D, D) matmul --
    ctx = _swap_leading(ctx).reshape(R, D).astype(jnp.bfloat16)          # (R, D)
    attn = jnp.dot(ctx, wo_ref[0],
                   preferred_element_type=jnp.float32) + bo_ref[0]

    # ---- post-norm residual + FFN(ReLU) + post-norm residual (dropout = identity) ---
    n1 = _layer_norm(attn + x, g1_ref[0], bn1_ref[0])
    h1 = jnp.maximum(
        jnp.dot(n1.astype(jnp.bfloat16), w1_ref[0],
                preferred_element_type=jnp.float32) + b1_ref[0], 0.0)
    ff = jnp.dot(h1.astype(jnp.bfloat16), w2_ref[0],
                 preferred_element_type=jnp.float32) + b2_ref[0]
    o_ref[...] = _layer_norm(ff + n1, g2_ref[0], bn2_ref[0])


def encoder_stack_pallas(x0, packed, *, d_model, n_heads, seq_len, batch_pad, batch_tile):
    L = packed['wqkv'].shape[0]
    hidden = packed['w1'].shape[-1]
    rows = batch_tile * seq_len
    n_bt = batch_pad // batch_tile
    use_mask = batch_tile > 1

    row_map = lambda bt, l: (bt, 0)      # constant along l -> VMEM-resident across layers
    const_map = lambda bt, l: (0, 0)

    def layer_map(rank):
        zeros = (0,) * (rank - 1)
        return lambda bt, l: (l,) + zeros

    vmem_limit = _vmem_limit_bytes()

    # When the (bf16) FFN weights would dominate the VMEM budget, drop them to a single
    # pipeline buffer.  TODO(synk): for very large d_model (v7x, 64 MiB VMEM), add a
    # hidden-dim tiling grid axis for w1/w2 instead of single-buffering.
    ffn_kwargs = {}
    if 4 * d_model * hidden * 2 > vmem_limit // 2:
        ffn_kwargs = dict(pipeline_mode=pl.Buffered(1))

    in_specs = [pl.BlockSpec((rows, d_model), row_map)]            # x0 (projector + PE)
    operands = [x0]
    if use_mask:
        row_seq = jnp.repeat(jnp.arange(batch_tile, dtype=jnp.int32), seq_len)
        mask = jnp.where(row_seq[:, None] == row_seq[None, :],
                         jnp.float32(0.0), jnp.float32(-1e30))
        in_specs.append(pl.BlockSpec((rows, rows), const_map))
        operands.append(mask)
    # TODO(synk): for very short sequences the block-diagonal mask wastes score FLOPs;
    # a (batch_tile*H)-batched seq x seq attention would remove that waste.

    in_specs += [
        pl.BlockSpec((1, d_model, 3 * d_model), layer_map(3)),     # wqkv (lane-dense, bf16)
        pl.BlockSpec((1, 1, 3 * d_model), layer_map(3)),           # bqkv (f32)
        pl.BlockSpec((1, d_model, d_model), layer_map(3)),         # wo (bf16)
        pl.BlockSpec((1, 1, d_model), layer_map(3)),               # bo
        pl.BlockSpec((1, 1, d_model), layer_map(3)),               # ln1 gamma
        pl.BlockSpec((1, 1, d_model), layer_map(3)),               # ln1 beta
        pl.BlockSpec((1, d_model, hidden), layer_map(3), **ffn_kwargs),   # w1 (bf16)
        pl.BlockSpec((1, 1, hidden), layer_map(3)),                # b1
        pl.BlockSpec((1, hidden, d_model), layer_map(3), **ffn_kwargs),   # w2 (bf16)
        pl.BlockSpec((1, 1, d_model), layer_map(3)),               # b2
        pl.BlockSpec((1, 1, d_model), layer_map(3)),               # ln2 gamma
        pl.BlockSpec((1, 1, d_model), layer_map(3)),               # ln2 beta
    ]
    operands += [packed['wqkv'], packed['bqkv'], packed['wo'], packed['bo'],
                 packed['g1'], packed['b_ln1'], packed['w1'], packed['b1'],
                 packed['w2'], packed['b2'], packed['g2'], packed['b_ln2']]

    out2d = pl.pallas_call(
        partial(_stack_kernel, n_heads=n_heads, use_mask=use_mask),
        out_shape=jax.ShapeDtypeStruct((batch_pad * seq_len, d_model), jnp.float32),
        grid=(n_bt, L),
        in_specs=in_specs,
        out_specs=pl.BlockSpec((rows, d_model), row_map),
        compiler_params=pltpu.CompilerParams(
            dimension_semantics=("parallel", "arbitrary"),
            vmem_limit_bytes=vmem_limit),
    )(*operands)
    return out2d


# ----------------------------- tiling policy -----------------------------

def _choose_batch_tile(batch, seq_len, target_rows=256):
    """Whole sequences per row tile, rows a multiple of 8, batch zero-padded (never
    inflated to the whole batch), and >= 2 batch tiles when the batch allows it
    (so v7x can shard the parallel axis across its two TensorCores)."""
    unit = 8 // math.gcd(seq_len, 8)                       # min sequences -> rows % 8 == 0
    per_tile = max(1, target_rows // max(seq_len, 1))
    bt = max(unit, (per_tile // unit) * unit)
    bt = min(bt, ((batch + unit - 1) // unit) * unit)      # never exceed (padded) batch
    if bt * 2 > batch and batch > unit:                    # prefer >= 2 tiles
        bt = max(unit, (((batch + 1) // 2) + unit - 1) // unit * unit)
    return bt


# ----------------------------- parameters / packing -----------------------------

def sinusoidal_pe(seq_len, d_model):
    pos = jnp.arange(seq_len, dtype=jnp.float32)[:, None]
    k = jnp.arange(d_model // 2, dtype=jnp.float32)[None, :]
    div = jnp.power(10000.0, (2.0 * k) / d_model)
    ang = pos / div
    pe = jnp.zeros((seq_len, d_model), jnp.float32)
    pe = pe.at[:, 0::2].set(jnp.sin(ang))
    pe = pe.at[:, 1::2].set(jnp.cos(ang))
    return pe


def init_params(key, basic_embed_dims, vocab_sizes_basic, embed_dims, vocab_sizes,
                num_cont_features, d_model, seq_len, num_layers, expansion_factor):
    keys = iter(jax.random.split(key, 256))

    def nrm(shape, scale=0.1):
        return (scale * jax.random.normal(next(keys), shape)).astype(jnp.float32)

    tables_basic = [nrm((vocab_sizes_basic[k], basic_embed_dims[k]), 0.02)
                    for k in basic_embed_dims]
    tables_detail = [nrm((vocab_sizes[k], embed_dims[k]), 0.02) for k in embed_dims]

    total_in = sum(basic_embed_dims.values()) + sum(embed_dims.values()) + 4
    f_in = total_in + num_cont_features
    hidden = expansion_factor * d_model

    blocks = []
    for _ in range(num_layers):
        blocks.append(dict(
            wq=nrm((d_model, d_model)), bq=jnp.zeros((1, d_model), jnp.float32),
            wk=nrm((d_model, d_model)), bk=jnp.zeros((1, d_model), jnp.float32),
            wv=nrm((d_model, d_model)), bv=jnp.zeros((1, d_model), jnp.float32),
            wo=nrm((d_model, d_model)), bo=jnp.zeros((1, d_model), jnp.float32),
            g1=jnp.ones((1, d_model), jnp.float32), b_ln1=jnp.zeros((1, d_model), jnp.float32),
            w1=nrm((d_model, hidden)), b1=jnp.zeros((1, hidden), jnp.float32),
            w2=nrm((hidden, d_model)), b2=jnp.zeros((1, d_model), jnp.float32),
            g2=jnp.ones((1, d_model), jnp.float32), b_ln2=jnp.zeros((1, d_model), jnp.float32),
        ))

    return dict(
        tables_basic=tables_basic, tables_detail=tables_detail,
        w_proj=nrm((f_in, d_model)), b_proj=jnp.zeros((1, d_model), jnp.float32),
        pe=sinusoidal_pe(seq_len, d_model), blocks=blocks)


def pack_encoder_params(params, *, d_model, n_heads):
    """One-time host-side repacking for the fused kernels:
       * fuse Q/K/V into one lane-dense (D, 3D) weight per layer (q | k | v column blocks),
         with 1/sqrt(dh) folded into the q weights/bias,
       * keep the output projection as a plain (D, D) weight,
       * store the big matmul weights in bf16 (f32 accumulation in-kernel),
       * stack all per-layer tensors along a leading layer axis,
       * zero-pad the projector's contracting dim to a multiple of 128."""
    H = n_heads
    assert d_model % H == 0, "d_model must be divisible by n_heads"
    dh = d_model // H
    inv = jnp.float32(1.0 / math.sqrt(dh))

    wqkv, bqkv, wo, bo = [], [], [], []
    g1, bln1, w1, b1, w2, b2, g2, bln2 = [], [], [], [], [], [], [], []
    for blk in params['blocks']:
        wqkv.append(jnp.concatenate([blk['wq'] * inv, blk['wk'], blk['wv']], axis=1))
        bqkv.append(jnp.concatenate([blk['bq'] * inv, blk['bk'], blk['bv']], axis=1))
        wo.append(blk['wo'])
        bo.append(blk['bo']); g1.append(blk['g1']); bln1.append(blk['b_ln1'])
        w1.append(blk['w1']); b1.append(blk['b1']); w2.append(blk['w2'])
        b2.append(blk['b2']); g2.append(blk['g2']); bln2.append(blk['b_ln2'])

    f_in = params['w_proj'].shape[0]
    f_pad = ((f_in + 127) // 128) * 128
    w_proj = jnp.zeros((f_pad, d_model), jnp.float32).at[:f_in, :].set(params['w_proj'])

    return dict(
        f_in=f_in,
        w_proj=w_proj, b_proj=params['b_proj'], pe=params['pe'],
        wqkv=jnp.stack(wqkv).astype(jnp.bfloat16),      # (L, D, 3D) lane-dense bf16
        bqkv=jnp.stack(bqkv),                           # (L, 1, 3D) f32
        wo=jnp.stack(wo).astype(jnp.bfloat16),          # (L, D, D)  bf16
        bo=jnp.stack(bo),
        g1=jnp.stack(g1), b_ln1=jnp.stack(bln1),
        w1=jnp.stack(w1).astype(jnp.bfloat16),          # (L, D, hidden) bf16
        b1=jnp.stack(b1),
        w2=jnp.stack(w2).astype(jnp.bfloat16),          # (L, hidden, D) bf16
        b2=jnp.stack(b2),
        g2=jnp.stack(g2), b_ln2=jnp.stack(bln2))


# ----------------------------- forward (glue + kernels) -----------------------------

def transformer_encoder(cat_inputs, cont_inputs, params, packed, *, d_model, n_heads):
    # HFEmbedding: per-feature embedding lookup (gather = plain-JAX glue), 4 passthrough cols.
    # TODO(synk): exact HFEmbedding source not provided; "+4" interpreted as 4 raw
    # passthrough features appended to the embedding output.
    parts = []
    col = 0
    for t in params['tables_basic']:
        parts.append(jnp.take(t, cat_inputs[..., col], axis=0)); col += 1
    for t in params['tables_detail']:
        parts.append(jnp.take(t, cat_inputs[..., col], axis=0)); col += 1
    parts.append(cat_inputs[..., col:col + 4].astype(jnp.float32))
    emb = jnp.concatenate(parts, axis=-1)
    feats = jnp.concatenate([emb, cont_inputs], axis=-1)           # (B, S, f_in)

    B, S, f_in = feats.shape
    batch_tile = _choose_batch_tile(B, S)
    B_pad = ((B + batch_tile - 1) // batch_tile) * batch_tile      # pad batch, never inflate
    rows = batch_tile * S
    n_bt = B_pad // batch_tile

    f_pad = packed['w_proj'].shape[0]
    feats = jnp.pad(feats, ((0, B_pad - B), (0, 0), (0, f_pad - f_in)))
    feats2d = feats.reshape(B_pad * S, f_pad).astype(jnp.float32)
    pe2d = jnp.tile(packed['pe'], (B_pad, 1))                      # (B_pad*S, D)

    # kernel 1: input projector + sqrt(d_model) scaling + positional encoding
    x0 = projector_pallas(feats2d, pe2d, packed['w_proj'], packed['b_proj'],
                          d_model=d_model, rows=rows, n_bt=n_bt)

    # kernel 2: fused stack of transformer blocks
    out2d = encoder_stack_pallas(x0, packed, d_model=d_model, n_heads=n_heads,
                                 seq_len=S, batch_pad=B_pad, batch_tile=batch_tile)
    return out2d.reshape(B_pad, S, d_model)[:B]


# ----------------------------- main -----------------------------

if __name__ == "__main__":
    basic_embed_dims = {"fa": 4, "fb": 4}
    vocab_sizes_basic = {"fa": 11, "fb": 7}
    embed_dims = {"fc": 8}
    vocab_sizes = {"fc": 23}
    num_cont_features = 6
    d_model, seq_len, num_layers, expansion_factor, n_heads = 32, 8, 2, 2, 4
    B = 2
    assert d_model % n_heads == 0

    key = jax.random.PRNGKey(0)
    kp, kc1, kc2, kcont = jax.random.split(key, 4)
    params = init_params(kp, basic_embed_dims, vocab_sizes_basic, embed_dims,
                         vocab_sizes, num_cont_features, d_model, seq_len,
                         num_layers, expansion_factor)
    packed = pack_encoder_params(params, d_model=d_model, n_heads=n_heads)

    n_cat = len(basic_embed_dims) + len(embed_dims)
    cat_idx = jax.random.randint(kc1, (B, seq_len, n_cat), 0, 7)       # valid for all vocabs
    cat_extra = jax.random.randint(kc2, (B, seq_len, 4), 0, 2)         # 4 passthrough cols
    cat_inputs = jnp.concatenate([cat_idx, cat_extra], axis=-1).astype(jnp.int32)
    cont_inputs = jax.random.normal(kcont, (B, seq_len, num_cont_features), jnp.float32)

    out = transformer_encoder(cat_inputs, cont_inputs, params, packed,
                              d_model=d_model, n_heads=n_heads)
    jax.block_until_ready(out)
    assert out.shape == (B, seq_len, d_model)
    assert bool(jnp.all(jnp.isfinite(out)))
    print("KERNEL_OK")
</pallas_src>

<mosaic_0001>
module attributes {stable_mosaic.version = 11 : i64} {
  func.func @_projector_kernel(%arg0: i32, %arg1: memref<8x128xf32, #tpu.memory_space<vmem>>, %arg2: memref<128x32xf32, #tpu.memory_space<vmem>>, %arg3: memref<1x32xf32, #tpu.memory_space<vmem>>, %arg4: memref<8x32xf32, #tpu.memory_space<vmem>>, %arg5: memref<8x32xf32, #tpu.memory_space<vmem>>) attributes {dimension_semantics = [#tpu.dimension_semantics<parallel>], iteration_bounds = array<i64: 2>, scalar_prefetch = 0 : i64, scratch_operands = 0 : i64, tpu.core_type = #tpu.core_type<tc>, window_params = [{transform_indices = @transform_0, window_bounds = array<i64: 8, 128>}, {pipeline_mode = #tpu.pipeline_mode<synchronous>, transform_indices = @transform_1, window_bounds = array<i64: 128, 32>}, {pipeline_mode = #tpu.pipeline_mode<synchronous>, transform_indices = @transform_2, window_bounds = array<i64: 1, 32>}, {transform_indices = @transform_3, window_bounds = array<i64: 8, 32>}, {transform_indices = @transform_4, window_bounds = array<i64: 8, 32>}]} {
    %c0 = arith.constant 0 : index
    %c0_0 = arith.constant 0 : index
    %0 = vector.load %arg1[%c0, %c0_0] : memref<8x128xf32, #tpu.memory_space<vmem>>, vector<8x128xf32>
    %c0_1 = arith.constant 0 : index
    %c0_2 = arith.constant 0 : index
    %1 = vector.load %arg2[%c0_1, %c0_2] : memref<128x32xf32, #tpu.memory_space<vmem>>, vector<128x32xf32>
    %cst = arith.constant dense<0.000000e+00> : vector<8x32xf32>
    %2 = tpu.matmul %0, %1, %cst {dimension_numbers = #tpu.dot_dimension_numbers<[1], [0], [0], [1], [0, 0, 1, 1], [], []>} : vector<8x128xf32>, vector<128x32xf32>, vector<8x32xf32> -> vector<8x32xf32>
    %c0_3 = arith.constant 0 : index
    %c0_4 = arith.constant 0 : index
    %3 = vector.load %arg3[%c0_3, %c0_4] : memref<1x32xf32, #tpu.memory_space<vmem>>, vector<1x32xf32>
    %4 = vector.broadcast %3 : vector<1x32xf32> to vector<8x32xf32>
    %5 = arith.addf %2, %4 : vector<8x32xf32>
    %cst_5 = arith.constant 5.65685415 : f32
    %6 = vector.broadcast %cst_5 : f32 to vector<8x32xf32>
    %7 = arith.mulf %5, %6 : vector<8x32xf32>
    %c0_6 = arith.constant 0 : index
    %c0_7 = arith.constant 0 : index
    %8 = vector.load %arg4[%c0_6, %c0_7] : memref<8x32xf32, #tpu.memory_space<vmem>>, vector<8x32xf32>
    %9 = arith.addf %7, %8 : vector<8x32xf32>
    %c0_8 = arith.constant 0 : index
    %c0_9 = arith.constant 0 : index
    %10 = vector.load %arg5[%c0_8, %c0_9] : memref<8x32xf32, #tpu.memory_space<vmem>>, vector<8x32xf32>
    tpu.vector_store %arg5[%c0_8, %c0_9], %9 {strides = array<i32>} : memref<8x32xf32, #tpu.memory_space<vmem>>, vector<8x32xf32>,
    return
  }
  func.func @transform_0(%arg0: i32) -> (i32, i32) {
    %c0_i32 = arith.constant 0 : i32
    %c0_i32_0 = arith.constant 0 : i32
    return %arg0, %c0_i32 : i32, i32
  }
  func.func @transform_1(%arg0: i32) -> (i32, i32) {
    %c0_i32 = arith.constant 0 : i32
    %c0_i32_0 = arith.constant 0 : i32
    %c0_i32_1 = arith.constant 0 : i32
    return %c0_i32, %c0_i32_0 : i32, i32
  }
  func.func @transform_2(%arg0: i32) -> (i32, i32) {
    %c0_i32 = arith.constant 0 : i32
    %c0_i32_0 = arith.constant 0 : i32
    %c0_i32_1 = arith.constant 0 : i32
    return %c0_i32, %c0_i32_0 : i32, i32
  }
  func.func @transform_3(%arg0: i32) -> (i32, i32) {
    %c0_i32 = arith.constant 0 : i32
    %c0_i32_0 = arith.constant 0 : i32
    return %arg0, %c0_i32 : i32, i32
  }
  func.func @transform_4(%arg0: i32) -> (i32, i32) {
    %c0_i32 = arith.constant 0 : i32
    %c0_i32_0 = arith.constant 0 : i32
    return %arg0, %c0_i32 : i32, i32
  }
}

</mosaic_0001>

<llo_original>
// kernel: tpu_custom_call.1
$region0: #{tpu_custom_call.1}
  #allocation0 [shape = 'u32[]', space=smem, size = 0x4, offset = 0x4, fixed_abs, tag = 'smem constant byte address 0x4 - core index']
  #allocation1 [shape = 'u32[144,128]{1,0:T(1,128)}', space=vmem, size = 0x12000, scoped, tag = 'internal scratch']
  %s0 = inlined_call_operand.vmem [shape: f32[16,128], index: 0, kind: input, shape index: {}]
  %s1 = inlined_call_operand.vmem [shape: f32[128,32], index: 1, kind: input, shape index: {}]
  %s2 = inlined_call_operand.vmem [shape: f32[1,32], index: 2, kind: input, shape index: {}]
  %s3 = inlined_call_operand.vmem [shape: f32[16,32], index: 3, kind: input, shape index: {}]
  %s4 = inlined_call_operand.hbm [shape: f32[16,32], index: 4, kind: output, shape index: {}]
  %s5 = sld [smem:[#allocation0]]
  $region49: #{tpu_custom_call.1} parent=0
    _
  %s7 = ssub.s32 1, %s5
  %s8 = scalar_select 0, %s7, %s5
  $region1: #{tpu_custom_call.1} parent=0
    #allocation2 [shape = 'u8[8192]{0}', space=vmem, size = 0x2000, scoped, tag = 'output window, operand 0']
    #allocation3 [shape = 's32[2]{0}', space=sflag, size = 0x8, scoped, tag = 'scoped memory for tpu_custom_call.1']
    %9 = vsyncpa [#allocation3], 0
    %s10 = scalar_lea.sflag [#allocation3], 1
    %11 = vsyncpa %s10, 0
    loop: start=0, step=1, limit=4
    $region2: #{tpu_custom_call.1} parent=1 // loop_pre_header
      _
    $region3: #{tpu_custom_call.1} parent=1 // loop_header
      %s13 = sphi 0, %s17
      %p14 = scmp.ge.s32.totalorder %s13, 4
      %s23 = sphi 0, %s25
      %s26 = sphi 0, %s23
      %s27 = sphi 0, %s26
      %s43 = sphi 0, %s27
      %s47 = sphi 0, %s47
      %s49 = sphi 0, %s47
      %s50 = sphi 0, %s49
      %s64 = sphi 0, %s50
      %s68 = sphi 0, %s68
      %s70 = sphi 0, %s68
      %s71 = sphi 0, %s70
      %s85 = sphi 0, %s71
      %s91 = sphi 0, %s93
      %s94 = sphi 0, %s91
      %s95 = sphi 0, %s94
      %s111 = sphi 0, %s95
      %s117 = sphi 0, %s119
      %s120 = sphi 0, %s117
      %s121 = sphi 0, %s120
      %s137 = sphi 0, %s121
    $region4: #{tpu_custom_call.1} parent=1 // loop_header_branch
      %16 = sbr.rel (%p14) target = $region8
    $region5: #{tpu_custom_call.1} parent=1 // loop_body
      %s18 = ssub.s32 %s13, 1
      %s19 = ssub.s32 %s13, 2
      %s20 = sadd.s32 %s13, 1
      %s21 = ssub.s32 %s13, %s20
      %p22 = scmp.eq.s32.totalorder %s21, 0
      %s24 = sadd.s32 %s23, 1
      %s25 = scalar_select %p22, %s23, %s24
      %p28 = pneg %p22
      %p29 = scmp.eq.s32.totalorder %s13, 1
      %p30 = por %p28, %p29
      %p31 = scmp.ne.s32.totalorder %s23, %s26
      %p32 = scmp.eq.s32.totalorder %s13, 0
      %p33 = por %p31, %p32
      %p34 = scmp.ne.s32.totalorder %s23, %s26
      %p35 = scmp.eq.s32.totalorder %s18, 1
      %p36 = por %p34, %p35
      %p37 = scmp.ne.s32.totalorder %s26, %s27
      %p38 = scmp.eq.s32.totalorder %s18, 0
      %p39 = por %p37, %p38
      %p40 = scmp.ne.s32.totalorder %s26, %s27
      %p41 = scmp.eq.s32.totalorder %s19, 1
      %p42 = por %p40, %p41
      %p44 = scmp.ne.s32.totalorder %s27, %s43
      %p45 = scmp.eq.s32.totalorder %s19, 0
      %p46 = por %p44, %p45
      %s48 = sadd.s32 %s47, 1
      %p51 = scmp.eq.s32.totalorder %s13, 1
      %p52 = scmp.ne.s32.totalorder %s47, %s49
      %p53 = scmp.eq.s32.totalorder %s13, 0
      %p54 = por %p52, %p53
      %p55 = scmp.ne.s32.totalorder %s47, %s49
      %p56 = scmp.eq.s32.totalorder %s18, 1
      %p57 = por %p55, %p56
      %p58 = scmp.ne.s32.totalorder %s49, %s50
      %p59 = scmp.eq.s32.totalorder %s18, 0
      %p60 = por %p58, %p59
      %p61 = scmp.ne.s32.totalorder %s49, %s50
      %p62 = scmp.eq.s32.totalorder %s19, 1
      %p63 = por %p61, %p62
      %p65 = scmp.ne.s32.totalorder %s50, %s64
      %p66 = scmp.eq.s32.totalorder %s19, 0
      %p67 = por %p65, %p66
      %s69 = sadd.s32 %s68, 1
      %p72 = scmp.eq.s32.totalorder %s13, 1
      %p73 = scmp.ne.s32.totalorder %s68, %s70
      %p74 = scmp.eq.s32.totalorder %s13, 0
      %p75 = por %p73, %p74
      %p76 = scmp.ne.s32.totalorder %s68, %s70
      %p77 = scmp.eq.s32.totalorder %s18, 1
      %p78 = por %p76, %p77
      %p79 = scmp.ne.s32.totalorder %s70, %s71
      %p80 = scmp.eq.s32.totalorder %s18, 0
      %p81 = por %p79, %p80
      %p82 = scmp.ne.s32.totalorder %s70, %s71
      %p83 = scmp.eq.s32.totalorder %s19, 1
      %p84 = por %p82, %p83
      %p86 = scmp.ne.s32.totalorder %s71, %s85
      %p87 = scmp.eq.s32.totalorder %s19, 0
      %p88 = por %p86, %p87
      %s89 = ssub.s32 %s13, %s20
      %p90 = scmp.eq.s32.totalorder %s89, 0
      %s92 = sadd.s32 %s91, 1
      %s93 = scalar_select %p90, %s91, %s92
      %p96 = pneg %p90
      %p97 = scmp.eq.s32.totalorder %s13, 1
      %p98 = por %p96, %p97
      %p99 = scmp.ne.s32.totalorder %s91, %s94
      %p100 = scmp.eq.s32.totalorder %s13, 0
      %p101 = por %p99, %p100
      %p102 = scmp.ne.s32.totalorder %s91, %s94
      %p103 = scmp.eq.s32.totalorder %s18, 1
      %p104 = por %p102, %p103
      %p105 = scmp.ne.s32.totalorder %s94, %s95
      %p106 = scmp.eq.s32.totalorder %s18, 0
      %p107 = por %p105, %p106
      %p108 = scmp.ne.s32.totalorder %s94, %s95
      %p109 = scmp.eq.s32.totalorder %s19, 1
      %p110 = por %p108, %p109
      %p112 = scmp.ne.s32.totalorder %s95, %s111
      %p113 = scmp.eq.s32.totalorder %s19, 0
      %p114 = por %p112, %p113
      %s115 = ssub.s32 %s13, %s20
      %p116 = scmp.eq.s32.totalorder %s115, 0
      %s118 = sadd.s32 %s117, 1
      %s119 = scalar_select %p116, %s117, %s118
      %p122 = pneg %p116
      %p123 = scmp.eq.s32.totalorder %s13, 1
      %p124 = por %p122, %p123
      %p125 = scmp.ne.s32.totalorder %s117, %s120
      %p126 = scmp.eq.s32.totalorder %s13, 0
      %p127 = por %p125, %p126
      %p128 = scmp.ne.s32.totalorder %s117, %s120
      %p129 = scmp.eq.s32.totalorder %s18, 1
      %p130 = por %p128, %p129
      %p131 = scmp.ne.s32.totalorder %s120, %s121
      %p132 = scmp.eq.s32.totalorder %s18, 0
      %p133 = por %p131, %p132
      %p134 = scmp.ne.s32.totalorder %s120, %s121
      %p135 = scmp.eq.s32.totalorder %s19, 1
      %p136 = por %p134, %p135
      %p138 = scmp.ne.s32.totalorder %s121, %s137
      %p139 = scmp.eq.s32.totalorder %s19, 0
      %p140 = por %p138, %p139
      %p141 = scmp.le.s32.totalorder 1, %s13
      %p142 = scmp.lt.s32.totalorder %s13, 3
      %p143 = pnand %p141, %p142
      %p144 = pneg %p143
      // Predicated region
      $region9: #{tpu_custom_call.1} parent=5 // pred_check
        _
      $region10: #{tpu_custom_call.1} parent=5 // pred_check_branch
        %146 = sbr.rel (%p143) target = $region12
      $region11: #{tpu_custom_call.1} parent=5 // pred_region
        %s147 = ssub.s32 %s13, 1
        // Predicated region
        $region13: #{tpu_custom_call.1} parent=11 // pred_check
          %p148 = pneg %p60
        $region14: #{tpu_custom_call.1} parent=11 // pred_check_branch
          %150 = sbr.rel (%p148) target = $region16
        $region15: #{tpu_custom_call.1} parent=11 // pred_region
          _
        $region16: #{tpu_custom_call.1} parent=11 // pred_fallthru
          _
        // Predicated region
        $region17: #{tpu_custom_call.1} parent=11 // pred_check
          %p151 = pneg %p81
        $region18: #{tpu_custom_call.1} parent=11 // pred_check_branch
          %153 = sbr.rel (%p151) target = $region20
        $region19: #{tpu_custom_call.1} parent=11 // pred_region
          _
        $region20: #{tpu_custom_call.1} parent=11 // pred_fallthru
          _
      $region12: #{tpu_custom_call.1} parent=5 // pred_fallthru
        _
      %p154 = scmp.lt.s32.totalorder %s13, 2
      // Predicated region
      $region21: #{tpu_custom_call.1} parent=5 // pred_check
        %p155 = pneg %p154
      $region22: #{tpu_custom_call.1} parent=5 // pred_check_branch
        %157 = sbr.rel (%p155) target = $region24
      $region23: #{tpu_custom_call.1} parent=5 // pred_region
        // Predicated region
        $region25: #{tpu_custom_call.1} parent=23 // pred_check
          %p158 = pneg %p33
        $region26: #{tpu_custom_call.1} parent=23 // pred_check_branch
          %160 = sbr.rel (%p158) target = $region28
        $region27: #{tpu_custom_call.1} parent=23 // pred_region
          %p161 = scmp.lt.s32.totalorder %s13, 1
          %s162 = scalar_select %p161, %s13, 1
          %s163 = smul.addr %s162, 8
          %s164 = scalar_lea.vmem %s0, %s163
        $region28: #{tpu_custom_call.1} parent=23 // pred_fallthru
          _
        // Predicated region
        $region29: #{tpu_custom_call.1} parent=23 // pred_check
          %p165 = pneg %p101
        $region30: #{tpu_custom_call.1} parent=23 // pred_check_branch
          %167 = sbr.rel (%p165) target = $region32
        $region31: #{tpu_custom_call.1} parent=23 // pred_region
          %p168 = scmp.lt.s32.totalorder %s13, 1
          %s169 = scalar_select %p168, %s13, 1
          %s170 = smul.addr %s169, 8
          %s171 = scalar_lea.vmem %s3, %s170
        $region32: #{tpu_custom_call.1} parent=23 // pred_fallthru
          _
      $region24: #{tpu_custom_call.1} parent=5 // pred_fallthru
        _
      %p172 = scmp.le.s32.totalorder 1, %s13
      %p173 = scmp.lt.s32.totalorder %s13, 3
      %p174 = pnand %p172, %p173
      %p175 = pneg %p174
      // Predicated region
      $region33: #{tpu_custom_call.1} parent=5 // pred_check
        _
      $region34: #{tpu_custom_call.1} parent=5 // pred_check_branch
        %177 = sbr.rel (%p174) target = $region36
      $region35: #{tpu_custom_call.1} parent=5 // pred_region
        %s178 = ssub.s32 %s13, 1
        %p179 = scmp.lt.s32.totalorder %s18, 1
        %s180 = scalar_select %p179, %s18, 1
        %s181 = smul.addr %s180, 8
        %s182 = scalar_lea.vmem %s0, %s181
        %p183 = pneg %p39
        %p184 = pneg %p36
        %p185 = pneg %p60
        %p186 = pneg %p57
        %p187 = pneg %p81
        %p188 = pneg %p78
        %p189 = scmp.lt.s32.totalorder %s18, 1
        %s190 = scalar_select %p189, %s18, 1
        %s191 = smul.addr %s190, 8
        %s192 = scalar_lea.vmem %s3, %s191
        %p193 = pneg %p107
        %p194 = pneg %p104
        %p195 = pneg %p133
        %p196 = pneg %p130
        %s197 = sand.u32 %s120, 1
        %s198 = scalar_lea.sflag [#allocation3], %s197
        %s199 = sand.u32 %s120, 1
        %s200 = smul.addr %s199, 8
        %s201 = scalar_lea.vmem [#allocation2], %s200
        %p202 = scmp.lt.s32.totalorder %s18, 1
        %s203 = scalar_select %p202, %s18, 1
        %s204 = smul.addr %s203, 8
        %s205 = scalar_lea.vmem %s0, %s204
        %p206 = scmp.lt.s32.totalorder %s18, 1
        %s207 = scalar_select %p206, %s18, 1
        %s208 = smul.addr %s207, 8
        %s209 = scalar_lea.vmem %s3, %s208
        %v210 = vld [vmem:[%s205] sm:$0xff]
        %v211 = vld [vmem:[%s1] sm:$0xff]
        %v212 = vld [vmem:[%s1 + $0x8] sm:$0xff]
        %v213 = vld [vmem:[%s1 + $0x10] sm:$0xff]
        %v214 = vld [vmem:[%s1 + $0x18] sm:$0xff]
        %v215 = vld [vmem:[%s1 + $0x20] sm:$0xff]
        %v216 = vld [vmem:[%s1 + $0x28] sm:$0xff]
        %v217 = vld [vmem:[%s1 + $0x30] sm:$0xff]
        %v218 = vld [vmem:[%s1 + $0x38] sm:$0xff]
        %v219 = vld [vmem:[%s1 + $0x40] sm:$0xff]
        %v220 = vld [vmem:[%s1 + $0x48] sm:$0xff]
        %v221 = vld [vmem:[%s1 + $0x50] sm:$0xff]
        %v222 = vld [vmem:[%s1 + $0x58] sm:$0xff]
        %v223 = vld [vmem:[%s1 + $0x60] sm:$0xff]
        %v224 = vld [vmem:[%s1 + $0x68] sm:$0xff]
        %v225 = vld [vmem:[%s1 + $0x70] sm:$0xff]
        %v226 = vld [vmem:[%s1 + $0x78] sm:$0xff]
        %v227 = vld [vmem:[%s2] sm:$0x1]
        %v229 = vlaneseq
        %v230 = vshrl.u32 %v229, 7
        %v231 = vsub.s32 0, %v230
        %v232 = vrot.slane %v227, %v231
        %234 = vmatprep.subr.mxu0 0.0
        %235 = vmatpush1.msra.mxu0 %v226
        %236 = vmatprep.subr.mxu0 0.0
        %237 = vmatpush1.msra.mxu0 %v225
        %238 = vmatprep.subr.mxu0 0.0
        %239 = vmatpush1.msra.mxu0 %v224
        %240 = vmatprep.subr.mxu0 0.0
        %241 = vmatpush1.msra.mxu0 %v223
        %242 = vmatprep.subr.mxu0 0.0
        %243 = vmatpush1.msra.mxu0 %v222
        %244 = vmatprep.subr.mxu0 0.0
        %245 = vmatpush1.msra.mxu0 %v221
        %246 = vmatprep.subr.mxu0 0.0
        %247 = vmatpush1.msra.mxu0 %v220
        %248 = vmatprep.subr.mxu0 0.0
        %249 = vmatpush1.msra.mxu0 %v219
        %250 = vmatprep.subr.mxu0 0.0
        %251 = vmatpush1.msra.mxu0 %v218
        %252 = vmatprep.subr.mxu0 0.0
        %253 = vmatpush1.msra.mxu0 %v217
        %254 = vmatprep.subr.mxu0 0.0
        %255 = vmatpush1.msra.mxu0 %v216
        %256 = vmatprep.subr.mxu0 0.0
        %257 = vmatpush1.msra.mxu0 %v215
        %258 = vmatprep.subr.mxu0 0.0
        %259 = vmatpush1.msra.mxu0 %v214
        %260 = vmatprep.subr.mxu0 0.0
        %261 = vmatpush1.msra.mxu0 %v213
        %262 = vmatprep.subr.mxu0 0.0
        %263 = vmatpush1.msra.mxu0 %v212
        %264 = vmatprep.subr.mxu0 0.0
        %265 = vmatpush1.msra.mxu0 %v211
        %266 = vmatprep.subr.mxu0 0.0
        %267 = vmatpush2.msra.mxu0 0.0
        %268 = vmatprep.subr.mxu0 0.0
        %269 = vmatpush2.msra.mxu0 0.0
        %270 = vmatprep.subr.mxu0 0.0
        %271 = vmatpush2.msra.mxu0 0.0
        %272 = vmatprep.subr.mxu0 0.0
        %273 = vmatpush2.msra.mxu0 0.0
        %274 = vmatprep.subr.mxu0 0.0
        %275 = vmatpush2.msra.mxu0 0.0
        %276 = vmatprep.subr.mxu0 0.0
        %277 = vmatpush2.msra.mxu0 0.0
        %278 = vmatprep.subr.mxu0 0.0
        %279 = vmatpush2.msra.mxu0 0.0
        %280 = vmatprep.subr.mxu0 0.0
        %281 = vmatpush2.msra.mxu0 0.0
        %282 = vmatprep.subr.mxu0 0.0
        %283 = vmatpush2.msra.mxu0 0.0
        %284 = vmatprep.subr.mxu0 0.0
        %285 = vmatpush2.msra.mxu0 0.0
        %286 = vmatprep.subr.mxu0 0.0
        %287 = vmatpush2.msra.mxu0 0.0
        %288 = vmatprep.subr.mxu0 0.0
        %289 = vmatpush2.msra.mxu0 0.0
        %290 = vmatprep.subr.mxu0 0.0
        %291 = vmatpush2.msra.mxu0 0.0
        %292 = vmatprep.subr.mxu0 0.0
        %293 = vmatpush2.msra.mxu0 0.0
        %294 = vmatprep.subr.mxu0 0.0
        %295 = vmatpush2.msra.mxu0 0.0
        %296 = vmatprep.subr.mxu0 0.0
        %297 = vmatpush2.msra.mxu0 0.0
        %298 = vmatprep.mubr.f32.mxu0 0.0
        %299 = vmatmul.mubr.f32.gmra.mxu0 %v210
        %v300 = vpop.f32.mrf.mxu0
        %v301 = vadd.f32 %v232, %v300
        %v302 = vpop.f32.mrf.mxu0
        %303 = vdwg.mxu0
        %v304 = vmul.f32 %v301, 5.656854
        %v305 = vld [vmem:[%s209] sm:$0xff]
        %v306 = vadd.f32 %v304, %v305
        %vm307 = vcmask 261120
        %308 = vst.msk [vmem:[%s201] sm:$0xff] %vm307, %v306
        %s309 = sand.u32 %s120, 1
        %s310 = scalar_lea.sflag [#allocation3], %s309
        %s311 = sand.u32 %s120, 1
        %s312 = smul.addr %s311, 8
        %s313 = scalar_lea.vmem [#allocation2], %s312
        // Predicated region
        $region37: #{tpu_custom_call.1} parent=35 // pred_check
          %p314 = pneg %p130
        $region38: #{tpu_custom_call.1} parent=35 // pred_check_branch
          %316 = sbr.rel (%p314) target = $region40
        $region39: #{tpu_custom_call.1} parent=35 // pred_region
          %s318 = ssub.s32 128, 128
          %319 = vsyncadd %s310, %s318
          %s320 = smul.addr %s18, 128
          %s321 = scalar_lea.hbm %s4, %s320
          %s323 = sshll.u32 %s313, 4
          %s324 = int_to_ptr.vmem [resolvable:$true] %s323
          %326 = dma.vmem_to_hbm [thread:$0]  %s324, 128, %s321, %s310
        $region40: #{tpu_custom_call.1} parent=35 // pred_fallthru
          _
      $region36: #{tpu_custom_call.1} parent=5 // pred_fallthru
        _
      %p327 = scmp.le.s32.totalorder 2, %s13
      // Predicated region
      $region41: #{tpu_custom_call.1} parent=5 // pred_check
        %p328 = pneg %p327
      $region42: #{tpu_custom_call.1} parent=5 // pred_check_branch
        %330 = sbr.rel (%p328) target = $region44
      $region43: #{tpu_custom_call.1} parent=5 // pred_region
        %s331 = ssub.s32 %s13, 2
        // Predicated region
        $region45: #{tpu_custom_call.1} parent=43 // pred_check
          %p332 = pneg %p136
        $region46: #{tpu_custom_call.1} parent=43 // pred_check_branch
          %334 = sbr.rel (%p332) target = $region48
        $region47: #{tpu_custom_call.1} parent=43 // pred_region
          %s335 = sand.u32 %s121, 1
          %s336 = scalar_lea.sflag [#allocation3], %s335
          %s337 = sand.u32 %s121, 1
          %s338 = smul.addr %s337, 8
          %s339 = scalar_lea.vmem [#allocation2], %s338
          %340 = dma.done %s336, 128
        $region48: #{tpu_custom_call.1} parent=43 // pred_fallthru
          _
      $region44: #{tpu_custom_call.1} parent=5 // pred_fallthru
        _
    $region6: #{tpu_custom_call.1} parent=1 // loop_footer
      %s17 = sadd.s32 1, %s13
    $region7: #{tpu_custom_call.1} parent=1 // loop_footer_branch
      %12 = sbr.rel target = $region3
    $region8: #{tpu_custom_call.1} parent=1 // loop_exit
      _
    %341 = vsyncpa [#allocation3], 1
    %s342 = scalar_lea.sflag [#allocation3], 1
    %343 = vsyncpa %s342, 1

</llo_original>
